<compile_context>
chip_gen: v6e
topology: v6e:2x2x1
jax: 0.10.0
libtpu: 0.0.40
codegen_flags: <defaults>
</compile_context>

<pallas_src>
import functools

import jax
import jax.numpy as jnp
from jax.experimental import pallas as pl
from jax.experimental.pallas import tpu as pltpu


# ----------------------------------------------------------------------------
# Fused kernel: encoder head (both branches batched) + NCE logits.
# ----------------------------------------------------------------------------
def _ubernce_kernel(x_ref, w1_ref, b1_ref, w2_ref, b2_ref, queue_ref,
                    lpos_ref, lneg_ref, *, batch, inv_temp):
    # x_ref: (2B, C, S). AdaptiveAvgPool3d((1,1,1)) == mean over spatial dims.
    pooled = jnp.mean(x_ref[...], axis=2)                                   # (2B, C)

    # 1x1x1 Conv3d(feature_size, feature_size) + ReLU
    h = jnp.dot(pooled, w1_ref[...], preferred_element_type=jnp.float32)    # (2B, C)
    h = jnp.maximum(h + b1_ref[...], 0.0)

    # 1x1x1 Conv3d(feature_size, dim)
    f = jnp.dot(h, w2_ref[...], preferred_element_type=jnp.float32)         # (2B, D)
    f = f + b2_ref[...]

    # F.normalize(dim=1): x / max(||x||_2, 1e-12)  ==  x * rsqrt(max(||x||^2, 1e-24))
    sumsq = jnp.sum(f * f, axis=1, keepdims=True)                           # (2B, 1)
    f = f * jax.lax.rsqrt(jnp.maximum(sumsq, 1e-24))

    # Split branches; fold temperature into q once (pre-scales both l_pos, l_neg).
    q = f[:batch] * inv_temp                                                # (B, D)
    k = f[batch:]                                                           # (B, D)

    lpos_ref[...] = jnp.sum(q * k, axis=1, keepdims=True)                   # (B, 1)
    lneg_ref[...] = jnp.dot(q, queue_ref[...],
                            preferred_element_type=jnp.float32)             # (B, K)


def ubernce_logits(x_all, w1, b1, w2, b2, queue, temp):
    twoB, C, S = x_all.shape
    B = twoB // 2
    D = w2.shape[1]
    K = queue.shape[1]
    vmem = pl.BlockSpec(memory_space=pltpu.MemorySpace.VMEM)
    lpos, lneg = pl.pallas_call(
        functools.partial(_ubernce_kernel, batch=B, inv_temp=1.0 / temp),
        out_shape=(
            jax.ShapeDtypeStruct((B, 1), jnp.float32),
            jax.ShapeDtypeStruct((B, K), jnp.float32),
        ),
        in_specs=[vmem, vmem, vmem, vmem, vmem, vmem],
        out_specs=(vmem, vmem),
    )(x_all, w1, b1, w2, b2, queue)
    return lpos, lneg


# ----------------------------------------------------------------------------
# UberNCE forward (eval mode), parameters initialized deterministically.
# ----------------------------------------------------------------------------
class UberNCEPallas:
    def __init__(self, feature_size=32, dim=16, K=128, m=0.999, T=0.07, seed=0):
        self.dim, self.K, self.m, self.T = dim, K, m, T
        keys = jax.random.split(jax.random.PRNGKey(seed), 6)
        # Conv3d(feature_size, feature_size, 1) -> matmul weights stored (in, out)
        self.w1 = 0.05 * jax.random.normal(keys[0], (feature_size, feature_size), jnp.float32)
        self.b1 = 0.01 * jax.random.normal(keys[1], (1, feature_size), jnp.float32)
        # Conv3d(feature_size, dim, 1)
        self.w2 = 0.05 * jax.random.normal(keys[2], (feature_size, dim), jnp.float32)
        self.b2 = 0.01 * jax.random.normal(keys[3], (1, dim), jnp.float32)
        # encoder_k params are copied from encoder_q at init (eval => no momentum update)
        # queue: randn(dim, K), L2-normalized along dim=0
        queue = jax.random.normal(keys[4], (dim, K), jnp.float32)
        self.queue = queue / jnp.maximum(
            jnp.sqrt(jnp.sum(queue * queue, axis=0, keepdims=True)), 1e-12)
        # queue_label: all -1 at init
        self.queue_label = -jnp.ones((K,), jnp.int32)

    def __call__(self, block, k_label):
        # block: (B, 2, C, T, H, W) backbone features (backbone == identity, see TODO)
        B, N, C, T, H, W = block.shape
        assert N == 2
        S = T * H * W
        x1 = block[:, 0].reshape(B, C, S)
        x2 = block[:, 1].reshape(B, C, S)
        # Stack both branches into one batch -> single fused kernel launch.
        x_all = jnp.concatenate([x1, x2], axis=0)                           # (2B, C, S)

        lpos, lneg = ubernce_logits(x_all, self.w1, self.b1, self.w2, self.b2,
                                    self.queue, self.T)                     # (B,1), (B,K)
        logits = jnp.concatenate([lpos, lneg], axis=1)                      # (B, 1+K)

        # Label mask is trivially cheap: keep it in plain XLA.
        m_neg = k_label.astype(jnp.int32)[:, None] == self.queue_label[None, :]
        mask = jnp.concatenate(
            [jnp.ones((B, 1), dtype=jnp.bool_), m_neg], axis=1)             # (B, 1+K)
        return logits, mask


if __name__ == "__main__":
    B, C, T, H, W = 2, 32, 2, 4, 4     # feature_size = 32
    dim, K = 16, 128

    key = jax.random.PRNGKey(0)
    kb, kl = jax.random.split(key)
    block = jax.random.normal(kb, (B, 2, C, T, H, W), jnp.float32)
    k_label = jax.random.randint(kl, (B,), 0, 10, dtype=jnp.int32)

    model = UberNCEPallas(feature_size=C, dim=dim, K=K)
    logits, mask = model(block, k_label)
    logits = jax.block_until_ready(logits)
    mask = jax.block_until_ready(mask)

    assert logits.shape == (B, 1 + K) and logits.dtype == jnp.float32
    assert mask.shape == (B, 1 + K) and mask.dtype == jnp.bool_
    assert bool(jnp.all(mask[:, 0]))   # positive-pair column is always True
    assert bool(jnp.all(jnp.isfinite(logits)))

    print("KERNEL_OK")
</pallas_src>

<mosaic_0001>
module attributes {stable_mosaic.version = 11 : i64} {
  func.func @_ubernce_kernel(%arg0: memref<4x32x32xf32, #tpu.memory_space<vmem>>, %arg1: memref<32x32xf32, #tpu.memory_space<vmem>>, %arg2: memref<1x32xf32, #tpu.memory_space<vmem>>, %arg3: memref<32x16xf32, #tpu.memory_space<vmem>>, %arg4: memref<1x16xf32, #tpu.memory_space<vmem>>, %arg5: memref<16x128xf32, #tpu.memory_space<vmem>>, %arg6: memref<2x1xf32, #tpu.memory_space<vmem>>, %arg7: memref<2x128xf32, #tpu.memory_space<vmem>>) attributes {dimension_semantics = [], scalar_prefetch = 0 : i64, scratch_operands = 0 : i64, tpu.core_type = #tpu.core_type<tc>} {
    %c0 = arith.constant 0 : index
    %c0_0 = arith.constant 0 : index
    %c0_1 = arith.constant 0 : index
    %0 = vector.load %arg0[%c0, %c0_0, %c0_1] : memref<4x32x32xf32, #tpu.memory_space<vmem>>, vector<4x32x32xf32>
    %cst = arith.constant dense<0.000000e+00> : vector<4x32xf32>
    %1 = vector.multi_reduction <add>, %0, %cst [2] : vector<4x32x32xf32> to vector<4x32xf32>
    %cst_2 = arith.constant 3.200000e+01 : f32
    %2 = vector.broadcast %cst_2 : f32 to vector<4x32xf32>
    %3 = arith.divf %1, %2 : vector<4x32xf32>
    %c0_3 = arith.constant 0 : index
    %c0_4 = arith.constant 0 : index
    %4 = vector.load %arg1[%c0_3, %c0_4] : memref<32x32xf32, #tpu.memory_space<vmem>>, vector<32x32xf32>
    %cst_5 = arith.constant dense<0.000000e+00> : vector<4x32xf32>
    %5 = tpu.matmul %3, %4, %cst_5 {dimension_numbers = #tpu.dot_dimension_numbers<[1], [0], [0], [1], [0, 0, 1, 1], [], []>} : vector<4x32xf32>, vector<32x32xf32>, vector<4x32xf32> -> vector<4x32xf32>
    %c0_6 = arith.constant 0 : index
    %c0_7 = arith.constant 0 : index
    %6 = vector.load %arg2[%c0_6, %c0_7] : memref<1x32xf32, #tpu.memory_space<vmem>>, vector<1x32xf32>
    %7 = vector.broadcast %6 : vector<1x32xf32> to vector<4x32xf32>
    %8 = arith.addf %5, %7 : vector<4x32xf32>
    %cst_8 = arith.constant 0.000000e+00 : f32
    %9 = vector.broadcast %cst_8 : f32 to vector<4x32xf32>
    %10 = arith.maximumf %8, %9 : vector<4x32xf32>
    %c0_9 = arith.constant 0 : index
    %c0_10 = arith.constant 0 : index
    %11 = vector.load %arg3[%c0_9, %c0_10] : memref<32x16xf32, #tpu.memory_space<vmem>>, vector<32x16xf32>
    %cst_11 = arith.constant dense<0.000000e+00> : vector<4x16xf32>
    %12 = tpu.matmul %10, %11, %cst_11 {dimension_numbers = #tpu.dot_dimension_numbers<[1], [0], [0], [1], [0, 0, 1, 1], [], []>} : vector<4x32xf32>, vector<32x16xf32>, vector<4x16xf32> -> vector<4x16xf32>
    %c0_12 = arith.constant 0 : index
    %c0_13 = arith.constant 0 : index
    %13 = vector.load %arg4[%c0_12, %c0_13] : memref<1x16xf32, #tpu.memory_space<vmem>>, vector<1x16xf32>
    %14 = vector.broadcast %13 : vector<1x16xf32> to vector<4x16xf32>
    %15 = arith.addf %12, %14 : vector<4x16xf32>
    %16 = arith.mulf %15, %15 : vector<4x16xf32>
    %cst_14 = arith.constant dense<0.000000e+00> : vector<4xf32>
    %17 = vector.multi_reduction <add>, %16, %cst_14 [1] : vector<4x16xf32> to vector<4xf32>
    %18 = vector.shape_cast %17 : vector<4xf32> to vector<4x1xf32>
    %cst_15 = arith.constant 1.000000e-24 : f32
    %19 = vector.broadcast %cst_15 : f32 to vector<4x1xf32>
    %20 = arith.maximumf %18, %19 : vector<4x1xf32>
    %21 = math.rsqrt %20 : vector<4x1xf32>
    %22 = vector.broadcast %21 : vector<4x1xf32> to vector<4x16xf32>
    %23 = arith.mulf %15, %22 : vector<4x16xf32>
    %24 = vector.extract_strided_slice %23 {offsets = [0, 0], sizes = [2, 16], strides = [1, 1]} : vector<4x16xf32> to vector<2x16xf32>
    %cst_16 = arith.constant 14.2857141 : f32
    %25 = vector.broadcast %cst_16 : f32 to vector<2x16xf32>
    %26 = arith.mulf %24, %25 : vector<2x16xf32>
    %27 = vector.extract_strided_slice %23 {offsets = [2, 0], sizes = [2, 16], strides = [1, 1]} : vector<4x16xf32> to vector<2x16xf32>
    %28 = arith.mulf %26, %27 : vector<2x16xf32>
    %cst_17 = arith.constant dense<0.000000e+00> : vector<2xf32>
    %29 = vector.multi_reduction <add>, %28, %cst_17 [1] : vector<2x16xf32> to vector<2xf32>
    %30 = vector.shape_cast %29 : vector<2xf32> to vector<2x1xf32>
    %c0_18 = arith.constant 0 : index
    %c0_19 = arith.constant 0 : index
    %31 = vector.load %arg6[%c0_18, %c0_19] : memref<2x1xf32, #tpu.memory_space<vmem>>, vector<2x1xf32>
    tpu.vector_store %arg6[%c0_18, %c0_19], %30 {strides = array<i32>} : memref<2x1xf32, #tpu.memory_space<vmem>>, vector<2x1xf32>,
    %c0_20 = arith.constant 0 : index
    %c0_21 = arith.constant 0 : index
    %32 = vector.load %arg5[%c0_20, %c0_21] : memref<16x128xf32, #tpu.memory_space<vmem>>, vector<16x128xf32>
    %cst_22 = arith.constant dense<0.000000e+00> : vector<2x128xf32>
    %33 = tpu.matmul %26, %32, %cst_22 {dimension_numbers = #tpu.dot_dimension_numbers<[1], [0], [0], [1], [0, 0, 1, 1], [], []>} : vector<2x16xf32>, vector<16x128xf32>, vector<2x128xf32> -> vector<2x128xf32>
    %c0_23 = arith.constant 0 : index
    %c0_24 = arith.constant 0 : index
    %34 = vector.load %arg7[%c0_23, %c0_24] : memref<2x128xf32, #tpu.memory_space<vmem>>, vector<2x128xf32>
    tpu.vector_store %arg7[%c0_23, %c0_24], %33 {strides = array<i32>} : memref<2x128xf32, #tpu.memory_space<vmem>>, vector<2x128xf32>,
    return
  }
}

</mosaic_0001>

<llo_original>
// kernel: tpu_custom_call.1
$region0: #{tpu_custom_call.1}
  #allocation0 [shape = 'u32[]', space=smem, size = 0x4, offset = 0x4, fixed_abs, tag = 'smem constant byte address 0x4 - core index']
  #allocation1 [shape = 'u32[144,128]{1,0:T(1,128)}', space=vmem, size = 0x12000, scoped, tag = 'internal scratch']
  %s0 = inlined_call_operand.hbm [shape: f32[4,32,32], index: 0, kind: input, shape index: {}]
  %s1 = inlined_call_operand.vmem [shape: f32[32,32], index: 1, kind: input, shape index: {}]
  %s2 = inlined_call_operand.vmem [shape: f32[1,32], index: 2, kind: input, shape index: {}]
  %s3 = inlined_call_operand.vmem [shape: f32[32,16], index: 3, kind: input, shape index: {}]
  %s4 = inlined_call_operand.vmem [shape: f32[1,16], index: 4, kind: input, shape index: {}]
  %s5 = inlined_call_operand.vmem [shape: f32[16,128], index: 5, kind: input, shape index: {}]
  %s6 = inlined_call_operand.vmem [shape: f32[2,1], index: 6, kind: output, shape index: {0}]
  %s7 = inlined_call_operand.hbm [shape: f32[2,128], index: 7, kind: output, shape index: {1}]
  %8 = xla_tuple %s6, %s7
  %s9 = sld [smem:[#allocation0]]
  $region46: #{tpu_custom_call.1} parent=0
    _
  %s11 = ssub.s32 1, %s9
  %s12 = scalar_select 0, %s11, %s9
  $region1: #{tpu_custom_call.1} parent=0
    #allocation2 [shape = 'u8[65536]{0}', space=vmem, size = 0x10000, scoped, tag = 'input window, operand 0, single buffered']
    #allocation3 [shape = 's32[1]{0}', space=sflag, size = 0x4, scoped, tag = 'scoped memory for tpu_custom_call.1']
    #allocation4 [shape = 's32[1]{0}', space=sflag, size = 0x4, scoped, tag = 'scoped memory for tpu_custom_call.1']
    #allocation5 [shape = 'u8[1024]{0}', space=vmem, size = 0x400, scoped, tag = 'output window, operand 1, single buffered']
    %13 = vsyncpa [#allocation3], 0
    %14 = vsyncpa [#allocation4], 0
    // Predicated region
    $region2: #{tpu_custom_call.1} parent=1 // pred_check
      _
    $region3: #{tpu_custom_call.1} parent=1 // pred_check_branch
      %16 = sbr.rel (0) target = $region5
    $region4: #{tpu_custom_call.1} parent=1 // pred_region
      %s18 = ssub.s32 2048, 2048
      %19 = vsyncadd [#allocation3], %s18
      %s20 = sshll.u32 [#allocation2], 4
      %s21 = int_to_ptr.vmem [resolvable:$true] %s20
      %26 = dma.hbm_to_vmem [thread:$0]  %s0, 2048, %s21, [#allocation3], 128, 128, 8
    $region5: #{tpu_custom_call.1} parent=1 // pred_fallthru
      _
    // Predicated region
    $region6: #{tpu_custom_call.1} parent=1 // pred_check
      _
    $region7: #{tpu_custom_call.1} parent=1 // pred_check_branch
      %28 = sbr.rel (0) target = $region9
    $region8: #{tpu_custom_call.1} parent=1 // pred_region
      _
    $region9: #{tpu_custom_call.1} parent=1 // pred_fallthru
      _
    // Predicated region
    $region10: #{tpu_custom_call.1} parent=1 // pred_check
      _
    $region11: #{tpu_custom_call.1} parent=1 // pred_check_branch
      %30 = sbr.rel (0) target = $region13
    $region12: #{tpu_custom_call.1} parent=1 // pred_region
      _
    $region13: #{tpu_custom_call.1} parent=1 // pred_fallthru
      _
    // Predicated region
    $region14: #{tpu_custom_call.1} parent=1 // pred_check
      _
    $region15: #{tpu_custom_call.1} parent=1 // pred_check_branch
      %32 = sbr.rel (0) target = $region17
    $region16: #{tpu_custom_call.1} parent=1 // pred_region
      _
    $region17: #{tpu_custom_call.1} parent=1 // pred_fallthru
      _
    // Predicated region
    $region18: #{tpu_custom_call.1} parent=1 // pred_check
      _
    $region19: #{tpu_custom_call.1} parent=1 // pred_check_branch
      %34 = sbr.rel (0) target = $region21
    $region20: #{tpu_custom_call.1} parent=1 // pred_region
      _
    $region21: #{tpu_custom_call.1} parent=1 // pred_fallthru
      _
    // Predicated region
    $region22: #{tpu_custom_call.1} parent=1 // pred_check
      _
    $region23: #{tpu_custom_call.1} parent=1 // pred_check_branch
      %36 = sbr.rel (0) target = $region25
    $region24: #{tpu_custom_call.1} parent=1 // pred_region
      _
    $region25: #{tpu_custom_call.1} parent=1 // pred_fallthru
      _
    // Predicated region
    $region26: #{tpu_custom_call.1} parent=1 // pred_check
      _
    $region27: #{tpu_custom_call.1} parent=1 // pred_check_branch
      %38 = sbr.rel (0) target = $region29
    $region28: #{tpu_custom_call.1} parent=1 // pred_region
      %39 = dma.done [#allocation3], 2048
    $region29: #{tpu_custom_call.1} parent=1 // pred_fallthru
      _
    %v40 = vld [vmem:[#allocation2] sm:$0xff]
    %v41 = vld [vmem:[#allocation2 + $0x8] sm:$0xff]
    %v42 = vld [vmem:[#allocation2 + $0x10] sm:$0xff]
    %v43 = vld [vmem:[#allocation2 + $0x18] sm:$0xff]
    %v44 = vld [vmem:[#allocation2 + $0x20] sm:$0xff]
    %v45 = vld [vmem:[#allocation2 + $0x28] sm:$0xff]
    %v46 = vld [vmem:[#allocation2 + $0x30] sm:$0xff]
    %v47 = vld [vmem:[#allocation2 + $0x38] sm:$0xff]
    %v48 = vld [vmem:[#allocation2 + $0x40] sm:$0xff]
    %v49 = vld [vmem:[#allocation2 + $0x48] sm:$0xff]
    %v50 = vld [vmem:[#allocation2 + $0x50] sm:$0xff]
    %v51 = vld [vmem:[#allocation2 + $0x58] sm:$0xff]
    %v52 = vld [vmem:[#allocation2 + $0x60] sm:$0xff]
    %v53 = vld [vmem:[#allocation2 + $0x68] sm:$0xff]
    %v54 = vld [vmem:[#allocation2 + $0x70] sm:$0xff]
    %v55 = vld [vmem:[#allocation2 + $0x78] sm:$0xff]
    %vm56 = vcmask 261120
    %v57 = vsel %vm56, %v40, 0.0
    %58 = vadd.xlane.f32.xlu0 %v57
    %v59 = vpop.xlane.xlu0 %58
    %v60 = vsel %vm56, %v41, 0.0
    %61 = vadd.xlane.f32.xlu0 %v60
    %v62 = vpop.xlane.xlu0 %61
    %v63 = vsel %vm56, %v42, 0.0
    %64 = vadd.xlane.f32.xlu0 %v63
    %v65 = vpop.xlane.xlu0 %64
    %v66 = vsel %vm56, %v43, 0.0
    %67 = vadd.xlane.f32.xlu0 %v66
    %v68 = vpop.xlane.xlu0 %67
    %v69 = vsel %vm56, %v44, 0.0
    %70 = vadd.xlane.f32.xlu0 %v69
    %v71 = vpop.xlane.xlu0 %70
    %v72 = vsel %vm56, %v45, 0.0
    %73 = vadd.xlane.f32.xlu0 %v72
    %v74 = vpop.xlane.xlu0 %73
    %v75 = vsel %vm56, %v46, 0.0
    %76 = vadd.xlane.f32.xlu0 %v75
    %v77 = vpop.xlane.xlu0 %76
    %v78 = vsel %vm56, %v47, 0.0
    %79 = vadd.xlane.f32.xlu0 %v78
    %v80 = vpop.xlane.xlu0 %79
    %v81 = vsel %vm56, %v48, 0.0
    %82 = vadd.xlane.f32.xlu0 %v81
    %v83 = vpop.xlane.xlu0 %82
    %v84 = vsel %vm56, %v49, 0.0
    %85 = vadd.xlane.f32.xlu0 %v84
    %v86 = vpop.xlane.xlu0 %85
    %v87 = vsel %vm56, %v50, 0.0
    %88 = vadd.xlane.f32.xlu0 %v87
    %v89 = vpop.xlane.xlu0 %88
    %v90 = vsel %vm56, %v51, 0.0
    %91 = vadd.xlane.f32.xlu0 %v90
    %v92 = vpop.xlane.xlu0 %91
    %v93 = vsel %vm56, %v52, 0.0
    %94 = vadd.xlane.f32.xlu0 %v93
    %v95 = vpop.xlane.xlu0 %94
    %v96 = vsel %vm56, %v53, 0.0
    %97 = vadd.xlane.f32.xlu0 %v96
    %v98 = vpop.xlane.xlu0 %97
    %v99 = vsel %vm56, %v54, 0.0
    %100 = vadd.xlane.f32.xlu0 %v99
    %v101 = vpop.xlane.xlu0 %100
    %v102 = vsel %vm56, %v55, 0.0
    %103 = vadd.xlane.f32.xlu0 %v102
    %v104 = vpop.xlane.xlu0 %103
    %v105 = vrcp.pop 32.0
    %v106 = vmul.f32 %v59, %v105
    %v107 = vmul.f32 %v62, %v105
    %v108 = vmul.f32 %v65, %v105
    %v109 = vmul.f32 %v68, %v105
    %v110 = vmul.f32 %v71, %v105
    %v111 = vmul.f32 %v74, %v105
    %v112 = vmul.f32 %v77, %v105
    %v113 = vmul.f32 %v80, %v105
    %v114 = vmul.f32 %v83, %v105
    %v115 = vmul.f32 %v86, %v105
    %v116 = vmul.f32 %v89, %v105
    %v117 = vmul.f32 %v92, %v105
    %v118 = vmul.f32 %v95, %v105
    %v119 = vmul.f32 %v98, %v105
    %v120 = vmul.f32 %v101, %v105
    %v121 = vmul.f32 %v104, %v105
    %v122 = vld [vmem:[%s1] sm:$0xff]
    %v123 = vld [vmem:[%s1 + $0x8] sm:$0xff]
    %v124 = vld [vmem:[%s1 + $0x10] sm:$0xff]
    %v125 = vld [vmem:[%s1 + $0x18] sm:$0xff]
    %v126 = vld [vmem:[%s2] sm:$0x1]
    %v128 = vlaneseq
    %v129 = vshrl.u32 %v128, 7
    %v130 = vsub.s32 0, %v129
    %v131 = vrot.slane %v126, %v130
    %v149 = vlaneseq
    %v150 = vand.u32 %v149, 127
    %v151 = vlaneseq
    %v152 = vshrl.u32 %v151, 7
    %v153 = vsub.s32 %v150, %v152
    %v154 = vrot.slane %v106, %v153
    %v155 = vadd.s32 %v150, 4294967288
    %v156 = vlaneseq
    %v157 = vshrl.u32 %v156, 7
    %v158 = vsub.s32 %v155, %v157
    %v159 = vrot.slane %v107, %v158
    %vm160 = vcmask 130112
    %v161 = vsel %vm160, %v159, %v154
    %v162 = vadd.s32 %v150, 4294967280
    %v163 = vlaneseq
    %v164 = vshrl.u32 %v163, 7
    %v165 = vsub.s32 %v162, %v164
    %v166 = vrot.slane %v108, %v165
    %vm167 = vcmask 195712
    %v168 = vsel %vm167, %v166, %v161
    %v169 = vadd.s32 %v150, 4294967272
    %v170 = vlaneseq
    %v171 = vshrl.u32 %v170, 7
    %v172 = vsub.s32 %v169, %v171
    %v173 = vrot.slane %v109, %v172
    %vm174 = vcmask 261312
    %v175 = vsel %vm174, %v173, %v168
    %v176 = vlaneseq
    %v177 = vshrl.u32 %v176, 7
    %v178 = vsub.s32 %v150, %v177
    %v179 = vrot.slane %v110, %v178
    %v180 = vlaneseq
    %v181 = vshrl.u32 %v180, 7
    %v182 = vsub.s32 %v155, %v181
    %v183 = vrot.slane %v111, %v182
    %v184 = vsel %vm160, %v183, %v179
    %v185 = vlaneseq
    %v186 = vshrl.u32 %v185, 7
    %v187 = vsub.s32 %v162, %v186
    %v188 = vrot.slane %v112, %v187
    %v189 = vsel %vm167, %v188, %v184
    %v190 = vlaneseq
    %v191 = vshrl.u32 %v190, 7
    %v192 = vsub.s32 %v169, %v191
    %v193 = vrot.slane %v113, %v192
    %v194 = vsel %vm174, %v193, %v189
    %v195 = vlaneseq
    %v196 = vshrl.u32 %v195, 7
    %v197 = vsub.s32 %v150, %v196
    %v198 = vrot.slane %v114, %v197
    %v199 = vlaneseq
    %v200 = vshrl.u32 %v199, 7
    %v201 = vsub.s32 %v155, %v200
    %v202 = vrot.slane %v115, %v201
    %v203 = vsel %vm160, %v202, %v198
    %v204 = vlaneseq
    %v205 = vshrl.u32 %v204, 7
    %v206 = vsub.s32 %v162, %v205
    %v207 = vrot.slane %v116, %v206
    %v208 = vsel %vm167, %v207, %v203
    %v209 = vlaneseq
    %v210 = vshrl.u32 %v209, 7
    %v211 = vsub.s32 %v169, %v210
    %v212 = vrot.slane %v117, %v211
    %v213 = vsel %vm174, %v212, %v208
    %v214 = vlaneseq
    %v215 = vshrl.u32 %v214, 7
    %v216 = vsub.s32 %v150, %v215
    %v217 = vrot.slane %v118, %v216
    %v218 = vlaneseq
    %v219 = vshrl.u32 %v218, 7
    %v220 = vsub.s32 %v155, %v219
    %v221 = vrot.slane %v119, %v220
    %v222 = vsel %vm160, %v221, %v217
    %v223 = vlaneseq
    %v224 = vshrl.u32 %v223, 7
    %v225 = vsub.s32 %v162, %v224
    %v226 = vrot.slane %v120, %v225
    %v227 = vsel %vm167, %v226, %v222
    %v228 = vlaneseq
    %v229 = vshrl.u32 %v228, 7
    %v230 = vsub.s32 %v169, %v229
    %v231 = vrot.slane %v121, %v230
    %v232 = vsel %vm174, %v231, %v227
    %vm233 = vcmask 1041409
    %v234 = vsel %vm233, %v194, %v175
    %vm235 = vcmask 1042434
    %v236 = vsel %vm235, %v213, %v234
    %vm237 = vcmask 1043459
    %v238 = vsel %vm237, %v232, %v236
    %v239 = vsel %vm56, %v238, 0
    %241 = vmatprep.subr.mxu0 0.0
    %242 = vmatpush1.msra.mxu0 0.0
    %243 = vmatprep.subr.mxu0 0.0
    %244 = vmatpush1.msra.mxu0 0.0
    %245 = vmatprep.subr.mxu0 0.0
    %246 = vmatpush1.msra.mxu0 0.0
    %247 = vmatprep.subr.mxu0 0.0
    %248 = vmatpush1.msra.mxu0 0.0
    %249 = vmatprep.subr.mxu0 0.0
    %250 = vmatpush1.msra.mxu0 0.0
    %251 = vmatprep.subr.mxu0 0.0
    %252 = vmatpush1.msra.mxu0 0.0
    %253 = vmatprep.subr.mxu0 0.0
    %254 = vmatpush1.msra.mxu0 0.0
    %255 = vmatprep.subr.mxu0 0.0
    %256 = vmatpush1.msra.mxu0 0.0
    %257 = vmatprep.subr.mxu0 0.0
    %258 = vmatpush1.msra.mxu0 0.0
    %259 = vmatprep.subr.mxu0 0.0
    %260 = vmatpush1.msra.mxu0 0.0
    %261 = vmatprep.subr.mxu0 0.0
    %262 = vmatpush1.msra.mxu0 0.0
    %263 = vmatprep.subr.mxu0 0.0
    %264 = vmatpush1.msra.mxu0 0.0
    %265 = vmatprep.subr.mxu0 0.0
    %266 = vmatpush1.msra.mxu0 %v125
    %267 = vmatprep.subr.mxu0 0.0
    %268 = vmatpush1.msra.mxu0 %v124
    %269 = vmatprep.subr.mxu0 0.0
    %270 = vmatpush1.msra.mxu0 %v123
    %271 = vmatprep.subr.mxu0 0.0
    %272 = vmatpush1.msra.mxu0 %v122
    %273 = vmatprep.subr.mxu0 0.0
    %274 = vmatpush2.msra.mxu0 0.0
    %275 = vmatprep.subr.mxu0 0.0
    %276 = vmatpush2.msra.mxu0 0.0
    %277 = vmatprep.subr.mxu0 0.0
    %278 = vmatpush2.msra.mxu0 0.0
    %279 = vmatprep.subr.mxu0 0.0
    %280 = vmatpush2.msra.mxu0 0.0
    %281 = vmatprep.subr.mxu0 0.0
    %282 = vmatpush2.msra.mxu0 0.0
    %283 = vmatprep.subr.mxu0 0.0
    %284 = vmatpush2.msra.mxu0 0.0
    %285 = vmatprep.subr.mxu0 0.0
    %286 = vmatpush2.msra.mxu0 0.0
    %287 = vmatprep.subr.mxu0 0.0
    %288 = vmatpush2.msra.mxu0 0.0
    %289 = vmatprep.subr.mxu0 0.0
    %290 = vmatpush2.msra.mxu0 0.0
    %291 = vmatprep.subr.mxu0 0.0
    %292 = vmatpush2.msra.mxu0 0.0
    %293 = vmatprep.subr.mxu0 0.0
    %294 = vmatpush2.msra.mxu0 0.0
    %295 = vmatprep.subr.mxu0 0.0
    %296 = vmatpush2.msra.mxu0 0.0
    %297 = vmatprep.subr.mxu0 0.0
    %298 = vmatpush2.msra.mxu0 0.0
    %299 = vmatprep.subr.mxu0 0.0
    %300 = vmatpush2.msra.mxu0 0.0
    %301 = vmatprep.subr.mxu0 0.0
    %302 = vmatpush2.msra.mxu0 0.0
    %303 = vmatprep.subr.mxu0 0.0
    %304 = vmatpush2.msra.mxu0 0.0
    %305 = vmatprep.mubr.f32.mxu0 0.0
    %306 = vmatmul.mubr.f32.gmra.mxu0 %v239
    %v307 = vpop.f32.mrf.mxu0
    %v308 = vadd.f32 %v131, %v307
    %v309 = vpop.f32.mrf.mxu0
    %310 = vdwg.mxu0
    %v311 = vmax.f32 %v308, 0.0
    %v312 = vld [vmem:[%s3] sm:$0xff]
    %v313 = vld [vmem:[%s3 + $0x8] sm:$0xff]
    %v314 = vld [vmem:[%s3 + $0x10] sm:$0xff]
    %v315 = vld [vmem:[%s3 + $0x18] sm:$0xff]
    %v316 = vld [vmem:[%s4] sm:$0x1]
    %v318 = vlaneseq
    %v319 = vshrl.u32 %v318, 7
    %v320 = vsub.s32 0, %v319
    %v321 = vrot.slane %v316, %v320
    %v324 = vsel %vm56, %v311, 0
    %326 = vmatprep.subr.mxu0 0.0
    %327 = vmatpush1.msra.mxu0 0.0
    %328 = vmatprep.subr.mxu0 0.0
    %329 = vmatpush1.msra.mxu0 0.0
    %330 = vmatprep.subr.mxu0 0.0
    %331 = vmatpush1.msra.mxu0 0.0
    %332 = vmatprep.subr.mxu0 0.0
    %333 = vmatpush1.msra.mxu0 0.0
    %334 = vmatprep.subr.mxu0 0.0
    %335 = vmatpush1.msra.mxu0 0.0
    %336 = vmatprep.subr.mxu0 0.0
    %337 = vmatpush1.msra.mxu0 0.0
    %338 = vmatprep.subr.mxu0 0.0
    %339 = vmatpush1.msra.mxu0 0.0
    %340 = vmatprep.subr.mxu0 0.0
    %341 = vmatpush1.msra.mxu0 0.0
    %342 = vmatprep.subr.mxu0 0.0
    %343 = vmatpush1.msra.mxu0 0.0
    %344 = vmatprep.subr.mxu0 0.0
    %345 = vmatpush1.msra.mxu0 0.0
    %346 = vmatprep.subr.mxu0 0.0
    %347 = vmatpush1.msra.mxu0 0.0
    %348 = vmatprep.subr.mxu0 0.0
    %349 = vmatpush1.msra.mxu0 0.0
    %350 = vmatprep.subr.mxu0 0.0
    %351 = vmatpush1.msra.mxu0 %v315
    %352 = vmatprep.subr.mxu0 0.0
    %353 = vmatpush1.msra.mxu0 %v314
    %354 = vmatprep.subr.mxu0 0.0
    %355 = vmatpush1.msra.mxu0 %v313
    %356 = vmatprep.subr.mxu0 0.0
    %357 = vmatpush1.msra.mxu0 %v312
    %358 = vmatprep.subr.mxu0 0.0
    %359 = vmatpush2.msra.mxu0 0.0
    %360 = vmatprep.subr.mxu0 0.0
    %361 = vmatpush2.msra.mxu0 0.0
    %362 = vmatprep.subr.mxu0 0.0
    %363 = vmatpush2.msra.mxu0 0.0
    %364 = vmatprep.subr.mxu0 0.0
    %365 = vmatpush2.msra.mxu0 0.0
    %366 = vmatprep.subr.mxu0 0.0
    %367 = vmatpush2.msra.mxu0 0.0
    %368 = vmatprep.subr.mxu0 0.0
    %369 = vmatpush2.msra.mxu0 0.0
    %370 = vmatprep.subr.mxu0 0.0
    %371 = vmatpush2.msra.mxu0 0.0
    %372 = vmatprep.subr.mxu0 0.0
    %373 = vmatpush2.msra.mxu0 0.0
    %374 = vmatprep.subr.mxu0 0.0
    %375 = vmatpush2.msra.mxu0 0.0
    %376 = vmatprep.subr.mxu0 0.0
    %377 = vmatpush2.msra.mxu0 0.0
    %378 = vmatprep.subr.mxu0 0.0
    %379 = vmatpush2.msra.mxu0 0.0
    %380 = vmatprep.subr.mxu0 0.0
    %381 = vmatpush2.msra.mxu0 0.0
    %382 = vmatprep.subr.mxu0 0.0
    %383 = vmatpush2.msra.mxu0 0.0
    %384 = vmatprep.subr.mxu0 0.0
    %385 = vmatpush2.msra.mxu0 0.0
    %386 = vmatprep.subr.mxu0 0.0
    %387 = vmatpush2.msra.mxu0 0.0
    %388 = vmatprep.subr.mxu0 0.0
    %389 = vmatpush2.msra.mxu0 0.0
    %390 = vmatprep.mubr.f32.mxu0 0.0
    %391 = vmatmul.mubr.f32.gmra.mxu0 %v324
    %v392 = vpop.f32.mrf.mxu0
    %v393 = vadd.f32 %v321, %v392
    %v394 = vpop.f32.mrf.mxu0
    %395 = vdwg.mxu0
    %v396 = vmul.f32 %v393, %v393
    %vm397 = vcmask 125952
    %v398 = vsel %vm397, %v396, 0.0
    %399 = vadd.xlane.f32.xlu0 %v398
    %v400 = vpop.xlane.xlu0 %399
    %v401 = vmax.f32 %v400, 1e-24
    %v402 = vrsqrt.pop %v401
    %v403 = vmul.f32 %v393, %v402
    %v404 = vmul.f32 %v403, 14.285714
    %v406 = vrot.slane %v403, 2
    %v408 = vmul.f32 %v404, %v406
    %vm409 = vcmask 123904
    %v410 = vsel %vm409, %v408, 0.0
    %411 = vadd.xlane.f32.xlu0 %v410
    %v412 = vpop.xlane.xlu0 %411
    %vm413 = vcmask 1024
    %414 = vst.msk [vmem:[%s6] sm:$0x3] %vm413, %v412
    %v415 = vld [vmem:[%s5] sm:$0xff]
    %v416 = vld [vmem:[%s5 + $0x8] sm:$0xff]
    %vm417 = vcmask 130048
    %v419 = vsel %vm417, %v404, 0
    %421 = vmatprep.subr.mxu0 0.0
    %422 = vmatpush1.msra.mxu0 0.0
    %423 = vmatprep.subr.mxu0 0.0
    %424 = vmatpush1.msra.mxu0 0.0
    %425 = vmatprep.subr.mxu0 0.0
    %426 = vmatpush1.msra.mxu0 0.0
    %427 = vmatprep.subr.mxu0 0.0
    %428 = vmatpush1.msra.mxu0 0.0
    %429 = vmatprep.subr.mxu0 0.0
    %430 = vmatpush1.msra.mxu0 0.0
    %431 = vmatprep.subr.mxu0 0.0
    %432 = vmatpush1.msra.mxu0 0.0
    %433 = vmatprep.subr.mxu0 0.0
    %434 = vmatpush1.msra.mxu0 0.0
    %435 = vmatprep.subr.mxu0 0.0
    %436 = vmatpush1.msra.mxu0 0.0
    %437 = vmatprep.subr.mxu0 0.0
    %438 = vmatpush1.msra.mxu0 0.0
    %439 = vmatprep.subr.mxu0 0.0
    %440 = vmatpush1.msra.mxu0 0.0
    %441 = vmatprep.subr.mxu0 0.0
    %442 = vmatpush1.msra.mxu0 0.0
    %443 = vmatprep.subr.mxu0 0.0
    %444 = vmatpush1.msra.mxu0 0.0
    %445 = vmatprep.subr.mxu0 0.0
    %446 = vmatpush1.msra.mxu0 0.0
    %447 = vmatprep.subr.mxu0 0.0
    %448 = vmatpush1.msra.mxu0 0.0
    %449 = vmatprep.subr.mxu0 0.0
    %450 = vmatpush1.msra.mxu0 %v416
    %451 = vmatprep.subr.mxu0 0.0
    %452 = vmatpush1.msra.mxu0 %v415
    %453 = vmatprep.subr.mxu0 0.0
    %454 = vmatpush2.msra.mxu0 0.0
    %455 = vmatprep.subr.mxu0 0.0
    %456 = vmatpush2.msra.mxu0 0.0
    %457 = vmatprep.subr.mxu0 0.0
    %458 = vmatpush2.msra.mxu0 0.0
    %459 = vmatprep.subr.mxu0 0.0
    %460 = vmatpush2.msra.mxu0 0.0
    %461 = vmatprep.subr.mxu0 0.0
    %462 = vmatpush2.msra.mxu0 0.0
    %463 = vmatprep.subr.mxu0 0.0
    %464 = vmatpush2.msra.mxu0 0.0
    %465 = vmatprep.subr.mxu0 0.0
    %466 = vmatpush2.msra.mxu0 0.0
    %467 = vmatprep.subr.mxu0 0.0
    %468 = vmatpush2.msra.mxu0 0.0
    %469 = vmatprep.subr.mxu0 0.0
    %470 = vmatpush2.msra.mxu0 0.0
    %471 = vmatprep.subr.mxu0 0.0
    %472 = vmatpush2.msra.mxu0 0.0
    %473 = vmatprep.subr.mxu0 0.0
    %474 = vmatpush2.msra.mxu0 0.0
    %475 = vmatprep.subr.mxu0 0.0
    %476 = vmatpush2.msra.mxu0 0.0
    %477 = vmatprep.subr.mxu0 0.0
    %478 = vmatpush2.msra.mxu0 0.0
    %479 = vmatprep.subr.mxu0 0.0
    %480 = vmatpush2.msra.mxu0 0.0
    %481 = vmatprep.subr.mxu0 0.0
    %482 = vmatpush2.msra.mxu0 0.0
    %483 = vmatprep.subr.mxu0 0.0
    %484 = vmatpush2.msra.mxu0 0.0
    %485 = vmatprep.mubr.f32.mxu0 0.0
    %486 = vmatmul.mubr.f32.gmra.mxu0 %v419
    %v487 = vpop.f32.mrf.mxu0
    %v488 = vadd.f32 0.0, %v487
    %v489 = vpop.f32.mrf.mxu0
    %490 = vdwg.mxu0
    %491 = vst [vmem:[#allocation5] sm:$0x3] %v488
    // Predicated region
    $region30: #{tpu_custom_call.1} parent=1 // pred_check
      _
    $region31: #{tpu_custom_call.1} parent=1 // pred_check_branch
      %493 = sbr.rel (0) target = $region33
    $region32: #{tpu_custom_call.1} parent=1 // pred_region
      _
    $region33: #{tpu_custom_call.1} parent=1 // pred_fallthru
      _
    // Predicated region
    $region34: #{tpu_custom_call.1} parent=1 // pred_check
      _
    $region35: #{tpu_custom_call.1} parent=1 // pred_check_branch
      %495 = sbr.rel (0) target = $region37
    $region36: #{tpu_custom_call.1} parent=1 // pred_region
      %s497 = ssub.s32 32, 32
      %498 = vsyncadd [#allocation4], %s497
      %s500 = sshll.u32 [#allocation5], 4
      %s501 = int_to_ptr.vmem [resolvable:$true] %s500
      %503 = dma.vmem_to_hbm [thread:$0]  %s501, 32, %s7, [#allocation4]
    $region37: #{tpu_custom_call.1} parent=1 // pred_fallthru
      _
    // Predicated region
    $region38: #{tpu_custom_call.1} parent=1 // pred_check
      _
    $region39: #{tpu_custom_call.1} parent=1 // pred_check_branch
      %505 = sbr.rel (0) target = $region41
    $region40: #{tpu_custom_call.1} parent=1 // pred_region
      _
    $region41: #{tpu_custom_call.1} parent=1 // pred_fallthru
      _
    // Predicated region
    $region42: #{tpu_custom_call.1} parent=1 // pred_check
      _
    $region43: #{tpu_custom_call.1} parent=1 // pred_check_branch
      %507 = sbr.rel (0) target = $region45
    $region44: #{tpu_custom_call.1} parent=1 // pred_region
      %508 = dma.done [#allocation4], 32
    $region45: #{tpu_custom_call.1} parent=1 // pred_fallthru
      _
    %509 = vsyncpa [#allocation3], 1
    %510 = vsyncpa [#allocation4], 1

</llo_original>
